<compile_context>
chip_gen: v5e
topology: v5e:2x2
jax: 0.10.0
libtpu: 0.0.40
codegen_flags: <defaults>
</compile_context>

<pallas_src>
import math

import jax
import jax.numpy as jnp
from jax.experimental import pallas as pl
from jax.experimental.pallas import tpu as pltpu

_LANE = 128     # lane width (last-dim tiling)
_SUBLANE = 16   # safe sublane multiple for both f32 (8) and bf16 (16) blocks


def _round_up(x, m):
    return ((x + m - 1) // m) * m


def _cdiv(a, b):
    return (a + b - 1) // b


# ----------------------------------------------------------------------------
# Kernel body: one batch tile of  Linear -> ReLU -> Linear -> ReLU -> Linear
# -> tanh.  All three layers run in a single body; weights are VMEM-resident.
# ----------------------------------------------------------------------------
def _actor_td3_kernel(x_ref, w1_ref, b1_ref, w2_ref, b2_ref, w3_ref, b3_ref,
                      out_ref):
    mm_dtype = w1_ref.dtype                      # bf16 (fast path) or f32
    x = x_ref[...].astype(mm_dtype)              # cast inside the kernel

    # Layer 1: Linear + ReLU (MXU matmul, f32 accumulation, f32 elementwise)
    h = jnp.dot(x, w1_ref[...], preferred_element_type=jnp.float32) + b1_ref[...]
    h = jnp.maximum(h, 0.0)
    # Layer 2: Linear + ReLU
    h = jnp.dot(h.astype(mm_dtype), w2_ref[...],
                preferred_element_type=jnp.float32) + b2_ref[...]
    h = jnp.maximum(h, 0.0)
    # Output layer: Linear + tanh (tanh on EUP, stays f32)
    h = jnp.dot(h.astype(mm_dtype), w3_ref[...],
                preferred_element_type=jnp.float32) + b3_ref[...]
    out_ref[...] = jnp.tanh(h).astype(out_ref.dtype)


# ----------------------------------------------------------------------------
# One-time parameter preparation (lane padding + cast) — NOT in the hot path.
# ----------------------------------------------------------------------------
def prepare_actor_td3_params(params, *, matmul_dtype=jnp.bfloat16):
    """Pad weight/bias feature dims to multiples of 128 lanes and cast weights
    to the matmul dtype.  Call once; reuse the result for every forward."""
    w1, b1 = params["w1"], params["b1"]
    w2, b2 = params["w2"], params["b2"]
    w3, b3 = params["w3"], params["b3"]
    state_dim = w1.shape[0]
    h1, h2, action_dim = w1.shape[1], w2.shape[1], w3.shape[1]
    H1 = _round_up(h1, _LANE)
    H2 = _round_up(h2, _LANE)
    A = _round_up(action_dim, _LANE)

    def padc(a, rows, cols, dtype):
        return jnp.pad(a, ((0, rows - a.shape[0]),
                           (0, cols - a.shape[1]))).astype(dtype)

    return dict(
        w1=padc(w1, state_dim, H1, matmul_dtype),
        b1=padc(b1, 1, H1, jnp.float32),
        w2=padc(w2, H1, H2, matmul_dtype),
        b2=padc(b2, 1, H2, jnp.float32),
        w3=padc(w3, H2, A, matmul_dtype),
        b3=padc(b3, 1, A, jnp.float32),
        state_dim=state_dim,
        action_dim=action_dim,
    )


def _vmem_estimate(TB, S, H1, H2, A, mm_bytes, in_bytes, out_bytes):
    """Rough VMEM footprint of one grid step (double-buffered blocks +
    intermediates)."""
    weights = 2 * mm_bytes * (S * H1 + H1 * H2 + H2 * A)
    biases = 2 * 4 * (H1 + H2 + A)
    x_blk = 2 * in_bytes * TB * S
    o_blk = 2 * out_bytes * TB * A
    interm = TB * (H1 + H2) * (4 + mm_bytes) + TB * A * 4
    return weights + biases + x_blk + o_blk + interm


# ----------------------------------------------------------------------------
# Forward wrapper
# ----------------------------------------------------------------------------
def actor_td3_forward(state, prepared, *, batch_tile=1024,
                      vmem_budget_bytes=48 * 1024 * 1024,
                      out_dtype=jnp.bfloat16,
                      return_padded=False):
    """state: (B, state_dim); prepared: output of prepare_actor_td3_params.

    Returns (B, action_dim) actions in [-1, 1] (dtype = out_dtype), or the
    padded (B_pad, A) slab if return_padded=True (lets the consumer slice)."""
    B, state_dim = state.shape
    assert state_dim == prepared["state_dim"]
    w1, b1 = prepared["w1"], prepared["b1"]
    w2, b2 = prepared["w2"], prepared["b2"]
    w3, b3 = prepared["w3"], prepared["b3"]
    H1, H2, A = w1.shape[1], w2.shape[1], w3.shape[1]
    action_dim = prepared["action_dim"]

    mm_bytes = jnp.dtype(w1.dtype).itemsize
    in_bytes = jnp.dtype(state.dtype).itemsize
    out_bytes = jnp.dtype(out_dtype).itemsize

    # ---- batch tile selection --------------------------------------------
    # Start big, shrink until the per-step VMEM estimate fits the budget.
    TB = min(_round_up(B, _SUBLANE), _round_up(batch_tile, _SUBLANE))
    while TB > _SUBLANE and _vmem_estimate(
            TB, state_dim, H1, H2, A, mm_bytes, in_bytes,
            out_bytes) > vmem_budget_bytes:
        TB = max(_SUBLANE, _round_up(TB // 2, _SUBLANE))

    n_tiles = _cdiv(B, TB)
    # v7x megacore: give both TensorCores work once the batch is big enough.
    if n_tiles == 1 and B >= 256:
        n_tiles = 2
    if n_tiles > 1 and n_tiles % 2:
        n_tiles += 1
    # Balance the tiles so an unlucky B does not add ~TB dead rows.
    TB = _round_up(_cdiv(B, n_tiles), _SUBLANE)
    B_pad = TB * n_tiles

    state_in = state if B_pad == B else jnp.pad(state, ((0, B_pad - B), (0, 0)))

    # ---- VMEM limit + cost estimate ---------------------------------------
    est = _vmem_estimate(TB, state_dim, H1, H2, A, mm_bytes, in_bytes,
                         out_bytes)
    vmem_limit = min(max(int(est * 1.5) + (4 << 20), 16 << 20), 64 << 20)

    flops = 2 * B_pad * (state_dim * H1 + H1 * H2 + H2 * A)
    bytes_accessed = (B_pad * state_dim * in_bytes
                      + (w1.size + w2.size + w3.size) * mm_bytes
                      + (b1.size + b2.size + b3.size) * 4
                      + B_pad * A * out_bytes)
    cost = pl.CostEstimate(flops=flops, transcendentals=B_pad * A,
                           bytes_accessed=bytes_accessed)

    # ---- pallas_call -------------------------------------------------------
    resident = lambda i: (0, 0)   # weights/biases: same block every grid step
    out_pad = pl.pallas_call(
        _actor_td3_kernel,
        out_shape=jax.ShapeDtypeStruct((B_pad, A), out_dtype),
        grid=(n_tiles,),
        in_specs=[
            pl.BlockSpec((TB, state_dim), lambda i: (i, 0)),  # state tile
            pl.BlockSpec((state_dim, H1), resident),
            pl.BlockSpec((1, H1), resident),
            pl.BlockSpec((H1, H2), resident),
            pl.BlockSpec((1, H2), resident),
            pl.BlockSpec((H2, A), resident),
            pl.BlockSpec((1, A), resident),
        ],
        out_specs=pl.BlockSpec((TB, A), lambda i: (i, 0)),
        compiler_params=pltpu.CompilerParams(
            dimension_semantics=("parallel",),   # megacore-shard the batch
            vmem_limit_bytes=vmem_limit),
        cost_estimate=cost,
    )(state_in, w1, b1, w2, b2, w3, b3)

    if return_padded:
        return out_pad
    return out_pad[:B, :action_dim]


# ----------------------------------------------------------------------------
# Parameter init (PyTorch-style Linear init) and pure-JAX reference.
# ----------------------------------------------------------------------------
def init_actor_td3_params(key, state_dim, action_dim, net_dims):
    """uniform(-1/sqrt(fan_in), 1/sqrt(fan_in)); weights (in, out), bias (1, out)."""
    dims = [state_dim, *net_dims, action_dim]
    assert len(dims) == 4, "this kernel is written for 2 hidden layers"
    params = {}
    for i in range(3):
        fan_in, fan_out = dims[i], dims[i + 1]
        key, kw, kb = jax.random.split(key, 3)
        bound = 1.0 / math.sqrt(fan_in)
        params[f"w{i+1}"] = jax.random.uniform(
            kw, (fan_in, fan_out), jnp.float32, -bound, bound)
        params[f"b{i+1}"] = jax.random.uniform(
            kb, (1, fan_out), jnp.float32, -bound, bound)
    return params


def _reference_forward(state, params):
    """Pure-JAX f32 reference (mirrors the PyTorch module)."""
    h = jnp.maximum(state @ params["w1"] + params["b1"], 0.0)
    h = jnp.maximum(h @ params["w2"] + params["b2"], 0.0)
    return jnp.tanh(h @ params["w3"] + params["b3"])


if __name__ == "__main__":
    # TODO(synk): Config().activation is not defined in the snippet; ReLU
    # (the ElegantRL default) is assumed.
    key = jax.random.PRNGKey(0)
    k_param, k_state = jax.random.split(key)

    batch = 2
    state_dim = 16
    net_dims = (32, 32)
    action_dim = 8

    params = init_actor_td3_params(k_param, state_dim, action_dim, net_dims)
    state = jax.random.normal(k_state, (batch, state_dim), dtype=jnp.float32)

    ref = _reference_forward(state, params)

    # f32 matmul + f32 output path: exact match against the reference.
    prep_f32 = prepare_actor_td3_params(params, matmul_dtype=jnp.float32)
    out_f32 = jax.block_until_ready(
        actor_td3_forward(state, prep_f32, out_dtype=jnp.float32))
    assert out_f32.shape == (batch, action_dim)
    assert jnp.allclose(out_f32, ref, atol=1e-5, rtol=1e-5), "f32 mismatch"

    # bf16 matmul + bf16 output (recommended fast path): looser tolerance.
    prep_bf16 = prepare_actor_td3_params(params, matmul_dtype=jnp.bfloat16)
    out_bf16 = jax.block_until_ready(
        actor_td3_forward(state, prep_bf16, out_dtype=jnp.bfloat16))
    assert out_bf16.shape == (batch, action_dim)
    assert jnp.allclose(out_bf16.astype(jnp.float32), ref,
                        atol=3e-2, rtol=3e-2), "bf16 mismatch"

    print("KERNEL_OK")
</pallas_src>

<mosaic_0001>
module attributes {stable_mosaic.version = 11 : i64} {
  func.func @_actor_td3_kernel(%arg0: i32, %arg1: memref<16x16xf32, #tpu.memory_space<vmem>>, %arg2: memref<16x128xf32, #tpu.memory_space<vmem>>, %arg3: memref<1x128xf32, #tpu.memory_space<vmem>>, %arg4: memref<128x128xf32, #tpu.memory_space<vmem>>, %arg5: memref<1x128xf32, #tpu.memory_space<vmem>>, %arg6: memref<128x128xf32, #tpu.memory_space<vmem>>, %arg7: memref<1x128xf32, #tpu.memory_space<vmem>>, %arg8: memref<16x128xf32, #tpu.memory_space<vmem>>) attributes {dimension_semantics = [#tpu.dimension_semantics<parallel>], iteration_bounds = array<i64: 1>, scalar_prefetch = 0 : i64, scratch_operands = 0 : i64, tpu.core_type = #tpu.core_type<tc>, window_params = [{transform_indices = @transform_0, window_bounds = array<i64: 16, 16>}, {pipeline_mode = #tpu.pipeline_mode<synchronous>, transform_indices = @transform_1, window_bounds = array<i64: 16, 128>}, {pipeline_mode = #tpu.pipeline_mode<synchronous>, transform_indices = @transform_2, window_bounds = array<i64: 1, 128>}, {pipeline_mode = #tpu.pipeline_mode<synchronous>, transform_indices = @transform_3, window_bounds = array<i64: 128, 128>}, {pipeline_mode = #tpu.pipeline_mode<synchronous>, transform_indices = @transform_4, window_bounds = array<i64: 1, 128>}, {pipeline_mode = #tpu.pipeline_mode<synchronous>, transform_indices = @transform_5, window_bounds = array<i64: 128, 128>}, {pipeline_mode = #tpu.pipeline_mode<synchronous>, transform_indices = @transform_6, window_bounds = array<i64: 1, 128>}, {transform_indices = @transform_7, window_bounds = array<i64: 16, 128>}]} {
    %c0 = arith.constant 0 : index
    %c0_0 = arith.constant 0 : index
    %0 = vector.load %arg1[%c0, %c0_0] : memref<16x16xf32, #tpu.memory_space<vmem>>, vector<16x16xf32>
    %c0_1 = arith.constant 0 : index
    %c0_2 = arith.constant 0 : index
    %1 = vector.load %arg2[%c0_1, %c0_2] : memref<16x128xf32, #tpu.memory_space<vmem>>, vector<16x128xf32>
    %cst = arith.constant dense<0.000000e+00> : vector<16x128xf32>
    %2 = tpu.matmul %0, %1, %cst {dimension_numbers = #tpu.dot_dimension_numbers<[1], [0], [0], [1], [0, 0, 1, 1], [], []>} : vector<16x16xf32>, vector<16x128xf32>, vector<16x128xf32> -> vector<16x128xf32>
    %c0_3 = arith.constant 0 : index
    %c0_4 = arith.constant 0 : index
    %3 = vector.load %arg3[%c0_3, %c0_4] : memref<1x128xf32, #tpu.memory_space<vmem>>, vector<1x128xf32>
    %4 = vector.broadcast %3 : vector<1x128xf32> to vector<16x128xf32>
    %5 = arith.addf %2, %4 : vector<16x128xf32>
    %cst_5 = arith.constant 0.000000e+00 : f32
    %6 = vector.broadcast %cst_5 : f32 to vector<16x128xf32>
    %7 = arith.maximumf %5, %6 : vector<16x128xf32>
    %c0_6 = arith.constant 0 : index
    %c0_7 = arith.constant 0 : index
    %8 = vector.load %arg4[%c0_6, %c0_7] : memref<128x128xf32, #tpu.memory_space<vmem>>, vector<128x128xf32>
    %cst_8 = arith.constant dense<0.000000e+00> : vector<16x128xf32>
    %9 = tpu.matmul %7, %8, %cst_8 {dimension_numbers = #tpu.dot_dimension_numbers<[1], [0], [0], [1], [0, 0, 1, 1], [], []>} : vector<16x128xf32>, vector<128x128xf32>, vector<16x128xf32> -> vector<16x128xf32>
    %c0_9 = arith.constant 0 : index
    %c0_10 = arith.constant 0 : index
    %10 = vector.load %arg5[%c0_9, %c0_10] : memref<1x128xf32, #tpu.memory_space<vmem>>, vector<1x128xf32>
    %11 = vector.broadcast %10 : vector<1x128xf32> to vector<16x128xf32>
    %12 = arith.addf %9, %11 : vector<16x128xf32>
    %cst_11 = arith.constant 0.000000e+00 : f32
    %13 = vector.broadcast %cst_11 : f32 to vector<16x128xf32>
    %14 = arith.maximumf %12, %13 : vector<16x128xf32>
    %c0_12 = arith.constant 0 : index
    %c0_13 = arith.constant 0 : index
    %15 = vector.load %arg6[%c0_12, %c0_13] : memref<128x128xf32, #tpu.memory_space<vmem>>, vector<128x128xf32>
    %cst_14 = arith.constant dense<0.000000e+00> : vector<16x128xf32>
    %16 = tpu.matmul %14, %15, %cst_14 {dimension_numbers = #tpu.dot_dimension_numbers<[1], [0], [0], [1], [0, 0, 1, 1], [], []>} : vector<16x128xf32>, vector<128x128xf32>, vector<16x128xf32> -> vector<16x128xf32>
    %c0_15 = arith.constant 0 : index
    %c0_16 = arith.constant 0 : index
    %17 = vector.load %arg7[%c0_15, %c0_16] : memref<1x128xf32, #tpu.memory_space<vmem>>, vector<1x128xf32>
    %18 = vector.broadcast %17 : vector<1x128xf32> to vector<16x128xf32>
    %19 = arith.addf %16, %18 : vector<16x128xf32>
    %20 = math.tanh %19 : vector<16x128xf32>
    %c0_17 = arith.constant 0 : index
    %c0_18 = arith.constant 0 : index
    %21 = vector.load %arg8[%c0_17, %c0_18] : memref<16x128xf32, #tpu.memory_space<vmem>>, vector<16x128xf32>
    tpu.vector_store %arg8[%c0_17, %c0_18], %20 {strides = array<i32>} : memref<16x128xf32, #tpu.memory_space<vmem>>, vector<16x128xf32>,
    return
  }
  func.func @transform_0(%arg0: i32) -> (i32, i32) {
    %c0_i32 = arith.constant 0 : i32
    %c0_i32_0 = arith.constant 0 : i32
    return %arg0, %c0_i32 : i32, i32
  }
  func.func @transform_1(%arg0: i32) -> (i32, i32) {
    %c0_i32 = arith.constant 0 : i32
    %c0_i32_0 = arith.constant 0 : i32
    %c0_i32_1 = arith.constant 0 : i32
    return %c0_i32, %c0_i32_0 : i32, i32
  }
  func.func @transform_2(%arg0: i32) -> (i32, i32) {
    %c0_i32 = arith.constant 0 : i32
    %c0_i32_0 = arith.constant 0 : i32
    %c0_i32_1 = arith.constant 0 : i32
    return %c0_i32, %c0_i32_0 : i32, i32
  }
  func.func @transform_3(%arg0: i32) -> (i32, i32) {
    %c0_i32 = arith.constant 0 : i32
    %c0_i32_0 = arith.constant 0 : i32
    %c0_i32_1 = arith.constant 0 : i32
    return %c0_i32, %c0_i32_0 : i32, i32
  }
  func.func @transform_4(%arg0: i32) -> (i32, i32) {
    %c0_i32 = arith.constant 0 : i32
    %c0_i32_0 = arith.constant 0 : i32
    %c0_i32_1 = arith.constant 0 : i32
    return %c0_i32, %c0_i32_0 : i32, i32
  }
  func.func @transform_5(%arg0: i32) -> (i32, i32) {
    %c0_i32 = arith.constant 0 : i32
    %c0_i32_0 = arith.constant 0 : i32
    %c0_i32_1 = arith.constant 0 : i32
    return %c0_i32, %c0_i32_0 : i32, i32
  }
  func.func @transform_6(%arg0: i32) -> (i32, i32) {
    %c0_i32 = arith.constant 0 : i32
    %c0_i32_0 = arith.constant 0 : i32
    %c0_i32_1 = arith.constant 0 : i32
    return %c0_i32, %c0_i32_0 : i32, i32
  }
  func.func @transform_7(%arg0: i32) -> (i32, i32) {
    %c0_i32 = arith.constant 0 : i32
    %c0_i32_0 = arith.constant 0 : i32
    return %arg0, %c0_i32 : i32, i32
  }
}

</mosaic_0001>

<llo_original>
// kernel: tpu_custom_call.1
$region0: #{tpu_custom_call.1}
  #allocation0 [shape = 'u32[]', space=smem, size = 0x4, offset = 0x4, fixed_abs, tag = 'smem constant byte address 0x4 - core index']
  #allocation1 [shape = 'u32[72,128]{1,0:T(1,128)}', space=vmem, size = 0x9000, scoped, tag = 'internal scratch']
  %s0 = inlined_call_operand.hbm [shape: f32[16,16], index: 0, kind: input, shape index: {}]
  %s1 = inlined_call_operand.hbm [shape: f32[16,128], index: 1, kind: input, shape index: {}]
  %s2 = inlined_call_operand.vmem [shape: f32[1,128], index: 2, kind: input, shape index: {}]
  %s3 = inlined_call_operand.hbm [shape: f32[128,128], index: 3, kind: input, shape index: {}]
  %s4 = inlined_call_operand.vmem [shape: f32[1,128], index: 4, kind: input, shape index: {}]
  %s5 = inlined_call_operand.hbm [shape: f32[128,128], index: 5, kind: input, shape index: {}]
  %s6 = inlined_call_operand.vmem [shape: f32[1,128], index: 6, kind: input, shape index: {}]
  %s7 = inlined_call_operand.hbm [shape: f32[16,128], index: 7, kind: output, shape index: {}]
  %s8 = sld [smem:[#allocation0]]
  $region54: #{tpu_custom_call.1} parent=0
    _
  %s10 = ssub.s32 1, %s8
  %s11 = scalar_select 0, %s10, %s8
  $region1: #{tpu_custom_call.1} parent=0
    #allocation2 [shape = 'u8[8192]{0}', space=vmem, size = 0x2000, scoped, tag = 'input window, operand 0, single buffered']
    #allocation3 [shape = 's32[1]{0}', space=sflag, size = 0x4, scoped, tag = 'scoped memory for tpu_custom_call.1']
    #allocation4 [shape = 's32[1]{0}', space=sflag, size = 0x4, scoped, tag = 'scoped memory for tpu_custom_call.1']
    #allocation5 [shape = 'u8[8192]{0}', space=vmem, size = 0x2000, scoped, tag = 'input window, operand 1, single buffered']
    #allocation6 [shape = 's32[1]{0}', space=sflag, size = 0x4, scoped, tag = 'scoped memory for tpu_custom_call.1']
    #allocation7 [shape = 'u8[65536]{0}', space=vmem, size = 0x10000, scoped, tag = 'input window, operand 3, single buffered']
    #allocation8 [shape = 'u8[65536]{0}', space=vmem, size = 0x10000, scoped, tag = 'input window, operand 5, single buffered']
    #allocation9 [shape = 's32[1]{0}', space=sflag, size = 0x4, scoped, tag = 'scoped memory for tpu_custom_call.1']
    #allocation10 [shape = 'u8[8192]{0}', space=vmem, size = 0x2000, scoped, tag = 'output window, operand 0, single buffered']
    %12 = vsyncpa [#allocation3], 0
    %13 = vsyncpa [#allocation6], 0
    %14 = vsyncpa [#allocation9], 0
    %15 = vsyncpa [#allocation4], 0
    // Predicated region
    $region2: #{tpu_custom_call.1} parent=1 // pred_check
      _
    $region3: #{tpu_custom_call.1} parent=1 // pred_check_branch
      %17 = sbr.rel (0) target = $region5
    $region4: #{tpu_custom_call.1} parent=1 // pred_region
      %19 = vsyncadd [#allocation3], 0
      %s20 = sshll.u32 %s0, 4
      %s21 = int_to_ptr.hbm [resolvable:$true] %s20
      %s22 = sshll.u32 [#allocation2], 4
      %s23 = int_to_ptr.vmem [resolvable:$true] %s22
      %28 = dma.hbm_to_vmem [thread:$0]  %s21, 256, %s23, [#allocation3], 128, 128, 8
    $region5: #{tpu_custom_call.1} parent=1 // pred_fallthru
      _
    // Predicated region
    $region6: #{tpu_custom_call.1} parent=1 // pred_check
      _
    $region7: #{tpu_custom_call.1} parent=1 // pred_check_branch
      %30 = sbr.rel (0) target = $region9
    $region8: #{tpu_custom_call.1} parent=1 // pred_region
      %32 = vsyncadd [#allocation6], 0
      %s33 = sshll.u32 %s1, 4
      %s34 = int_to_ptr.hbm [resolvable:$true] %s33
      %s35 = sshll.u32 [#allocation5], 4
      %s36 = int_to_ptr.vmem [resolvable:$true] %s35
      %41 = dma.hbm_to_vmem [thread:$0]  %s34, 256, %s36, [#allocation6], 128, 128, 8
    $region9: #{tpu_custom_call.1} parent=1 // pred_fallthru
      _
    // Predicated region
    $region10: #{tpu_custom_call.1} parent=1 // pred_check
      _
    $region11: #{tpu_custom_call.1} parent=1 // pred_check_branch
      %43 = sbr.rel (0) target = $region13
    $region12: #{tpu_custom_call.1} parent=1 // pred_region
      _
    $region13: #{tpu_custom_call.1} parent=1 // pred_fallthru
      _
    // Predicated region
    $region14: #{tpu_custom_call.1} parent=1 // pred_check
      _
    $region15: #{tpu_custom_call.1} parent=1 // pred_check_branch
      %45 = sbr.rel (0) target = $region17
    $region16: #{tpu_custom_call.1} parent=1 // pred_region
      %47 = vsyncadd [#allocation6], 0
      %s48 = sshll.u32 %s3, 4
      %s49 = int_to_ptr.hbm [resolvable:$true] %s48
      %s50 = sshll.u32 [#allocation7], 4
      %s51 = int_to_ptr.vmem [resolvable:$true] %s50
      %56 = dma.hbm_to_vmem [thread:$0]  %s49, 2048, %s51, [#allocation6], 128, 128, 8
    $region17: #{tpu_custom_call.1} parent=1 // pred_fallthru
      _
    // Predicated region
    $region18: #{tpu_custom_call.1} parent=1 // pred_check
      _
    $region19: #{tpu_custom_call.1} parent=1 // pred_check_branch
      %58 = sbr.rel (0) target = $region21
    $region20: #{tpu_custom_call.1} parent=1 // pred_region
      _
    $region21: #{tpu_custom_call.1} parent=1 // pred_fallthru
      _
    // Predicated region
    $region22: #{tpu_custom_call.1} parent=1 // pred_check
      _
    $region23: #{tpu_custom_call.1} parent=1 // pred_check_branch
      %60 = sbr.rel (0) target = $region25
    $region24: #{tpu_custom_call.1} parent=1 // pred_region
      %62 = vsyncadd [#allocation9], 0
      %s63 = sshll.u32 %s5, 4
      %s64 = int_to_ptr.hbm [resolvable:$true] %s63
      %s65 = sshll.u32 [#allocation8], 4
      %s66 = int_to_ptr.vmem [resolvable:$true] %s65
      %71 = dma.hbm_to_vmem [thread:$0]  %s64, 2048, %s66, [#allocation9], 128, 128, 8
    $region25: #{tpu_custom_call.1} parent=1 // pred_fallthru
      _
    // Predicated region
    $region26: #{tpu_custom_call.1} parent=1 // pred_check
      _
    $region27: #{tpu_custom_call.1} parent=1 // pred_check_branch
      %73 = sbr.rel (0) target = $region29
    $region28: #{tpu_custom_call.1} parent=1 // pred_region
      _
    $region29: #{tpu_custom_call.1} parent=1 // pred_fallthru
      _
    // Predicated region
    $region30: #{tpu_custom_call.1} parent=1 // pred_check
      _
    $region31: #{tpu_custom_call.1} parent=1 // pred_check_branch
      %75 = sbr.rel (0) target = $region33
    $region32: #{tpu_custom_call.1} parent=1 // pred_region
      %77 = dma.done [#allocation3], 256
    $region33: #{tpu_custom_call.1} parent=1 // pred_fallthru
      _
    // Predicated region
    $region34: #{tpu_custom_call.1} parent=1 // pred_check
      _
    $region35: #{tpu_custom_call.1} parent=1 // pred_check_branch
      %79 = sbr.rel (0) target = $region37
    $region36: #{tpu_custom_call.1} parent=1 // pred_region
      %81 = dma.done [#allocation6], 256
    $region37: #{tpu_custom_call.1} parent=1 // pred_fallthru
      _
    // Predicated region
    $region38: #{tpu_custom_call.1} parent=1 // pred_check
      _
    $region39: #{tpu_custom_call.1} parent=1 // pred_check_branch
      %83 = sbr.rel (0) target = $region41
    $region40: #{tpu_custom_call.1} parent=1 // pred_region
      %85 = dma.done [#allocation6], 2048
    $region41: #{tpu_custom_call.1} parent=1 // pred_fallthru
      _
    // Predicated region
    $region42: #{tpu_custom_call.1} parent=1 // pred_check
      _
    $region43: #{tpu_custom_call.1} parent=1 // pred_check_branch
      %87 = sbr.rel (0) target = $region45
    $region44: #{tpu_custom_call.1} parent=1 // pred_region
      %89 = dma.done [#allocation9], 2048
    $region45: #{tpu_custom_call.1} parent=1 // pred_fallthru
      _
    %v90 = vld [vmem:[#allocation2] sm:$0xff]
    %v91 = vld [vmem:[#allocation2 + $0x8] sm:$0xff]
    %v92 = vld [vmem:[#allocation5] sm:$0xff]
    %v93 = vld [vmem:[#allocation5 + $0x8] sm:$0xff]
    %v94 = vld [vmem:[%s2] sm:$0x1]
    %v96 = vperm.slane %v94, 0
    %vm98 = vcmask 130048
    %v100 = vsel %vm98, %v90, 0
    %v103 = vsel %vm98, %v91, 0
    %105 = vmatpush.msra.mxu0 0.0
    %106 = vmatpush.msra.mxu0 0.0
    %107 = vmatpush.msra.mxu0 0.0
    %108 = vmatpush.msra.mxu0 0.0
    %109 = vmatpush.msra.mxu0 0.0
    %110 = vmatpush.msra.mxu0 0.0
    %111 = vmatpush.msra.mxu0 0.0
    %112 = vmatpush.msra.mxu0 0.0
    %113 = vmatpush.msra.mxu0 0.0
    %114 = vmatpush.msra.mxu0 0.0
    %115 = vmatpush.msra.mxu0 0.0
    %116 = vmatpush.msra.mxu0 0.0
    %117 = vmatpush.msra.mxu0 0.0
    %118 = vmatpush.msra.mxu0 0.0
    %119 = vmatpush.msra.mxu0 %v93
    %120 = vmatpush.msra.mxu0 %v92
    %121 = vmatmul.f32.gmra.mxu0 %v100
    %v122 = vpop.f32.mrf.mxu0
    %v123 = vadd.f32 %v96, %v122
    %124 = vmatmul.f32.gmra.mxu0 %v103
    %v125 = vpop.f32.mrf.mxu0
    %v126 = vadd.f32 %v96, %v125
    %127 = vdwg.mxu0
    %v128 = vmax.f32 %v123, 0.0
    %v129 = vmax.f32 %v126, 0.0
    %v130 = vld [vmem:[#allocation7] sm:$0xff]
    %v131 = vld [vmem:[#allocation7 + $0x8] sm:$0xff]
    %v132 = vld [vmem:[#allocation7 + $0x10] sm:$0xff]
    %v133 = vld [vmem:[#allocation7 + $0x18] sm:$0xff]
    %v134 = vld [vmem:[#allocation7 + $0x20] sm:$0xff]
    %v135 = vld [vmem:[#allocation7 + $0x28] sm:$0xff]
    %v136 = vld [vmem:[#allocation7 + $0x30] sm:$0xff]
    %v137 = vld [vmem:[#allocation7 + $0x38] sm:$0xff]
    %v138 = vld [vmem:[#allocation7 + $0x40] sm:$0xff]
    %v139 = vld [vmem:[#allocation7 + $0x48] sm:$0xff]
    %v140 = vld [vmem:[#allocation7 + $0x50] sm:$0xff]
    %v141 = vld [vmem:[#allocation7 + $0x58] sm:$0xff]
    %v142 = vld [vmem:[#allocation7 + $0x60] sm:$0xff]
    %v143 = vld [vmem:[#allocation7 + $0x68] sm:$0xff]
    %v144 = vld [vmem:[#allocation7 + $0x70] sm:$0xff]
    %v145 = vld [vmem:[#allocation7 + $0x78] sm:$0xff]
    %v146 = vld [vmem:[%s4] sm:$0x1]
    %v148 = vperm.slane %v146, 0
    %150 = vmatpush.msra.mxu0 %v145
    %151 = vmatpush.msra.mxu0 %v144
    %152 = vmatpush.msra.mxu0 %v143
    %153 = vmatpush.msra.mxu0 %v142
    %154 = vmatpush.msra.mxu0 %v141
    %155 = vmatpush.msra.mxu0 %v140
    %156 = vmatpush.msra.mxu0 %v139
    %157 = vmatpush.msra.mxu0 %v138
    %158 = vmatpush.msra.mxu0 %v137
    %159 = vmatpush.msra.mxu0 %v136
    %160 = vmatpush.msra.mxu0 %v135
    %161 = vmatpush.msra.mxu0 %v134
    %162 = vmatpush.msra.mxu0 %v133
    %163 = vmatpush.msra.mxu0 %v132
    %164 = vmatpush.msra.mxu0 %v131
    %165 = vmatpush.msra.mxu0 %v130
    %166 = vmatmul.f32.gmra.mxu0 %v128
    %v167 = vpop.f32.mrf.mxu0
    %v168 = vadd.f32 %v148, %v167
    %169 = vmatmul.f32.gmra.mxu0 %v129
    %v170 = vpop.f32.mrf.mxu0
    %v171 = vadd.f32 %v148, %v170
    %172 = vdwg.mxu0
    %v173 = vmax.f32 %v168, 0.0
    %v174 = vmax.f32 %v171, 0.0
    %v175 = vld [vmem:[#allocation8] sm:$0xff]
    %v176 = vld [vmem:[#allocation8 + $0x8] sm:$0xff]
    %v177 = vld [vmem:[#allocation8 + $0x10] sm:$0xff]
    %v178 = vld [vmem:[#allocation8 + $0x18] sm:$0xff]
    %v179 = vld [vmem:[#allocation8 + $0x20] sm:$0xff]
    %v180 = vld [vmem:[#allocation8 + $0x28] sm:$0xff]
    %v181 = vld [vmem:[#allocation8 + $0x30] sm:$0xff]
    %v182 = vld [vmem:[#allocation8 + $0x38] sm:$0xff]
    %v183 = vld [vmem:[#allocation8 + $0x40] sm:$0xff]
    %v184 = vld [vmem:[#allocation8 + $0x48] sm:$0xff]
    %v185 = vld [vmem:[#allocation8 + $0x50] sm:$0xff]
    %v186 = vld [vmem:[#allocation8 + $0x58] sm:$0xff]
    %v187 = vld [vmem:[#allocation8 + $0x60] sm:$0xff]
    %v188 = vld [vmem:[#allocation8 + $0x68] sm:$0xff]
    %v189 = vld [vmem:[#allocation8 + $0x70] sm:$0xff]
    %v190 = vld [vmem:[#allocation8 + $0x78] sm:$0xff]
    %v191 = vld [vmem:[%s6] sm:$0x1]
    %v193 = vperm.slane %v191, 0
    %195 = vmatpush.msra.mxu0 %v190
    %196 = vmatpush.msra.mxu0 %v189
    %197 = vmatpush.msra.mxu0 %v188
    %198 = vmatpush.msra.mxu0 %v187
    %199 = vmatpush.msra.mxu0 %v186
    %200 = vmatpush.msra.mxu0 %v185
    %201 = vmatpush.msra.mxu0 %v184
    %202 = vmatpush.msra.mxu0 %v183
    %203 = vmatpush.msra.mxu0 %v182
    %204 = vmatpush.msra.mxu0 %v181
    %205 = vmatpush.msra.mxu0 %v180
    %206 = vmatpush.msra.mxu0 %v179
    %207 = vmatpush.msra.mxu0 %v178
    %208 = vmatpush.msra.mxu0 %v177
    %209 = vmatpush.msra.mxu0 %v176
    %210 = vmatpush.msra.mxu0 %v175
    %211 = vmatmul.f32.gmra.mxu0 %v173
    %v212 = vpop.f32.mrf.mxu0
    %v213 = vadd.f32 %v193, %v212
    %214 = vmatmul.f32.gmra.mxu0 %v174
    %v215 = vpop.f32.mrf.mxu0
    %v216 = vadd.f32 %v193, %v215
    %217 = vdwg.mxu0
    %v218 = vtanh.pop %v213
    %v219 = vtanh.pop %v216
    %220 = vst [vmem:[#allocation10] sm:$0xff] %v218
    %221 = vst [vmem:[#allocation10 + $0x8] sm:$0xff] %v219
    // Predicated region
    $region46: #{tpu_custom_call.1} parent=1 // pred_check
      _
    $region47: #{tpu_custom_call.1} parent=1 // pred_check_branch
      %223 = sbr.rel (0) target = $region49
    $region48: #{tpu_custom_call.1} parent=1 // pred_region
      %225 = vsyncadd [#allocation4], 0
      %s226 = sshll.u32 [#allocation10], 4
      %s227 = int_to_ptr.vmem [resolvable:$true] %s226
      %s228 = sshll.u32 %s7, 4
      %s229 = int_to_ptr.hbm [resolvable:$true] %s228
      %234 = dma.vmem_to_hbm [thread:$0]  %s227, 256, %s229, [#allocation4], 128, 128, 8
    $region49: #{tpu_custom_call.1} parent=1 // pred_fallthru
      _
    // Predicated region
    $region50: #{tpu_custom_call.1} parent=1 // pred_check
      _
    $region51: #{tpu_custom_call.1} parent=1 // pred_check_branch
      %236 = sbr.rel (0) target = $region53
    $region52: #{tpu_custom_call.1} parent=1 // pred_region
      %238 = dma.done [#allocation4], 256
    $region53: #{tpu_custom_call.1} parent=1 // pred_fallthru
      _
    %239 = vsyncpa [#allocation3], 1
    %240 = vsyncpa [#allocation6], 1
    %241 = vsyncpa [#allocation9], 1
    %242 = vsyncpa [#allocation4], 1

</llo_original>
